<compile_context>
chip_gen: v6e
topology: v6e:2x2x1
jax: 0.10.0
libtpu: 0.0.40
codegen_flags: <defaults>
</compile_context>

<pallas_src>
import math

import jax
import jax.numpy as jnp
from jax.experimental import pallas as pl
from jax.experimental.pallas import tpu as pltpu


LANE = 128


def _round_up(n, m):
    return ((n + m - 1) // m) * m


def qnetwork_kernel(x_ref, w1_ref, b1_ref, w2_ref, b2_ref, w3_ref, b3_ref, o_ref):
    """relu(relu(x@W1+b1)@W2+b2)@W3+b3 for one batch tile; weights VMEM-resident.

    All three matmuls run on the MXU with f32 accumulation; bias-add + ReLU are
    fused elementwise epilogues.  fc1 is f32 x f32 (W1 kept f32 for precision —
    its DMA cost is negligible); fc2/fc3 take bf16 inputs (MXU-native).
    """
    # --- fc1: (Bb, S) @ (S, 512) + b1, ReLU.  K = state_size is tiny; the MXU is
    # idle here anyway, so padding the contraction dim costs nothing and it keeps
    # the VPU / register file free.
    h1 = jnp.maximum(
        jnp.dot(x_ref[...], w1_ref[...], preferred_element_type=jnp.float32)
        + b1_ref[...],
        0.0,
    )                                           # (Bb, 512) f32

    # --- fc2: bf16 inputs, f32 accumulation.
    h2 = jnp.maximum(
        jnp.dot(h1.astype(jnp.bfloat16), w2_ref[...],
                preferred_element_type=jnp.float32)
        + b2_ref[...],
        0.0,
    )                                           # (Bb, 256) f32

    # --- fc3: lane-dense padded output, stored bf16 (halves writeback DMA).
    out = (
        jnp.dot(h2.astype(jnp.bfloat16), w3_ref[...],
                preferred_element_type=jnp.float32)
        + b3_ref[...]
    )
    o_ref[...] = out.astype(o_ref.dtype)        # (Bb, A_pad) bf16, unmasked stores


def qnetwork_forward(x, kernel_params, action_size, *, block_b=None,
                     return_padded=False):
    """x: (B, state_size) f32.  Returns (B, action_size) bf16 Q-values, or the raw
    lane-dense (Bp, A_pad) slab when return_padded=True (preferred on the latency
    path: fuse the slice/argmax into the consumer instead of paying extra ops)."""
    w1, b1, w2, b2, w3, b3 = kernel_params
    B, S = x.shape
    A_pad = w3.shape[1]                         # lane-dense (multiple of 128)

    if block_b is None:
        if B >= 512:
            block_b = 256                       # fill v6e's 256-row MXU, halve steps
        elif B >= 128:
            block_b = 128
        else:
            block_b = _round_up(B, 8)           # single tile, no batch padding
    Bp = _round_up(B, block_b)
    if Bp != B:                                 # skipped whenever block_b divides B
        x = jnp.pad(x, ((0, Bp - B), (0, 0)))
    n_blocks = Bp // block_b

    # Shard batch tiles across TensorCores (v7x megacore) only when there are at
    # least two tiles; with a single tile it is pure overhead.
    batch_sem = "parallel" if n_blocks >= 2 else "arbitrary"

    flops = 2 * Bp * (S * 512 + 512 * 256 + 256 * A_pad)
    bytes_accessed = (
        Bp * S * 4                                              # x (f32)
        + w1.size * w1.dtype.itemsize + b1.size * 4             # weights/biases
        + w2.size * w2.dtype.itemsize + b2.size * 4             #   (one-time DMA)
        + w3.size * w3.dtype.itemsize + b3.size * 4
        + Bp * A_pad * 2                                        # out (bf16)
    )

    const2 = lambda i: (0, 0)
    out = pl.pallas_call(
        qnetwork_kernel,
        out_shape=jax.ShapeDtypeStruct((Bp, A_pad), jnp.bfloat16),
        grid=(n_blocks,),
        in_specs=[
            pl.BlockSpec((block_b, S), lambda i: (i, 0)),       # x: blocked on batch
            pl.BlockSpec((w1.shape[0], w1.shape[1]), const2),   # weights/biases:
            pl.BlockSpec((1, b1.shape[1]), const2),             #   constant block index
            pl.BlockSpec((w2.shape[0], w2.shape[1]), const2),   #   -> DMA'd once,
            pl.BlockSpec((1, b2.shape[1]), const2),             #   VMEM-resident across
            pl.BlockSpec((w3.shape[0], w3.shape[1]), const2),   #   all batch tiles
            pl.BlockSpec((1, b3.shape[1]), const2),
        ],
        out_specs=pl.BlockSpec((block_b, A_pad), lambda i: (i, 0)),
        compiler_params=pltpu.CompilerParams(
            dimension_semantics=(batch_sem,)),
        cost_estimate=pl.CostEstimate(
            flops=flops, transcendentals=0, bytes_accessed=bytes_accessed),
    )(x, w1, b1, w2, b2, w3, b3)

    if return_padded:
        return out
    if Bp != B:
        out = out[:B]
    return out[:, :action_size]


def init_qnetwork_params(key, state_size, action_size):
    """f32 master params mirroring PyTorch's default Linear init
    (uniform(-1/sqrt(fan_in), 1/sqrt(fan_in)) for weight and bias)."""
    dims = [(state_size, 512), (512, 256), (256, action_size)]
    params = []
    for fan_in, fan_out in dims:
        key, kw, kb = jax.random.split(key, 3)
        bound = 1.0 / math.sqrt(fan_in)
        w = jax.random.uniform(kw, (fan_in, fan_out), jnp.float32, -bound, bound)
        b = jax.random.uniform(kb, (1, fan_out), jnp.float32, -bound, bound)
        params.extend([w, b])
    return tuple(params)


def pack_kernel_params(master_params, action_size, *, lane=LANE):
    """W1 stays f32 (8 KB, fetched once; full fc1 precision for free); W2/W3 bf16
    (halved one-time weight DMA); f32 biases; W3/b3 zero-padded lane-dense."""
    w1, b1, w2, b2, w3, b3 = master_params
    a_pad = _round_up(action_size, lane)
    w3p = jnp.pad(w3, ((0, 0), (0, a_pad - action_size)))
    b3p = jnp.pad(b3, ((0, 0), (0, a_pad - action_size)))
    return (w1, b1,
            w2.astype(jnp.bfloat16), b2,
            w3p.astype(jnp.bfloat16), b3p)


def qnetwork_reference(x, master_params):
    """Plain-JAX f32 reference (matches the PyTorch module)."""
    w1, b1, w2, b2, w3, b3 = master_params
    h1 = jnp.maximum(x @ w1 + b1, 0.0)
    h2 = jnp.maximum(h1 @ w2 + b2, 0.0)
    return h2 @ w3 + b3


if __name__ == "__main__":
    # CartPole-v1: state_size=4, action_size=2. Small batch of 8 observations.
    state_size, action_size, batch = 4, 2, 8

    key = jax.random.PRNGKey(0)
    key, kx = jax.random.split(key)
    master = init_qnetwork_params(key, state_size, action_size)
    kparams = pack_kernel_params(master, action_size)
    x = jax.random.normal(kx, (batch, state_size), jnp.float32)

    q_vals = qnetwork_forward(x, kparams, action_size)
    q_vals = jax.block_until_ready(q_vals)

    ref = qnetwork_reference(x, master)
    assert q_vals.shape == (batch, action_size)
    # bf16 W2/W3, bf16 activation casts and bf16 output => looser tolerance than a
    # pure-f32 path (precision tradeoff, not a bug).
    assert jnp.allclose(q_vals.astype(jnp.float32), ref, atol=3e-2, rtol=3e-2), \
        "mismatch vs reference"

    print("KERNEL_OK")
</pallas_src>

<mosaic_0001>
module attributes {stable_mosaic.version = 11 : i64} {
  func.func @qnetwork_kernel(%arg0: i32, %arg1: memref<8x4xf32, #tpu.memory_space<vmem>>, %arg2: memref<4x512xf32, #tpu.memory_space<vmem>>, %arg3: memref<1x512xf32, #tpu.memory_space<vmem>>, %arg4: memref<512x256xbf16, #tpu.memory_space<vmem>>, %arg5: memref<1x256xf32, #tpu.memory_space<vmem>>, %arg6: memref<256x128xbf16, #tpu.memory_space<vmem>>, %arg7: memref<1x128xf32, #tpu.memory_space<vmem>>, %arg8: memref<8x128xbf16, #tpu.memory_space<vmem>>) attributes {dimension_semantics = [#tpu.dimension_semantics<arbitrary>], iteration_bounds = array<i64: 1>, scalar_prefetch = 0 : i64, scratch_operands = 0 : i64, tpu.core_type = #tpu.core_type<tc>, window_params = [{transform_indices = @transform_0, window_bounds = array<i64: 8, 4>}, {pipeline_mode = #tpu.pipeline_mode<synchronous>, transform_indices = @transform_1, window_bounds = array<i64: 4, 512>}, {pipeline_mode = #tpu.pipeline_mode<synchronous>, transform_indices = @transform_2, window_bounds = array<i64: 1, 512>}, {pipeline_mode = #tpu.pipeline_mode<synchronous>, transform_indices = @transform_3, window_bounds = array<i64: 512, 256>}, {pipeline_mode = #tpu.pipeline_mode<synchronous>, transform_indices = @transform_4, window_bounds = array<i64: 1, 256>}, {pipeline_mode = #tpu.pipeline_mode<synchronous>, transform_indices = @transform_5, window_bounds = array<i64: 256, 128>}, {pipeline_mode = #tpu.pipeline_mode<synchronous>, transform_indices = @transform_6, window_bounds = array<i64: 1, 128>}, {transform_indices = @transform_7, window_bounds = array<i64: 8, 128>}]} {
    %c0 = arith.constant 0 : index
    %c0_0 = arith.constant 0 : index
    %0 = vector.load %arg1[%c0, %c0_0] : memref<8x4xf32, #tpu.memory_space<vmem>>, vector<8x4xf32>
    %c0_1 = arith.constant 0 : index
    %c0_2 = arith.constant 0 : index
    %1 = vector.load %arg2[%c0_1, %c0_2] : memref<4x512xf32, #tpu.memory_space<vmem>>, vector<4x512xf32>
    %cst = arith.constant dense<0.000000e+00> : vector<8x512xf32>
    %2 = tpu.matmul %0, %1, %cst {dimension_numbers = #tpu.dot_dimension_numbers<[1], [0], [0], [1], [0, 0, 1, 1], [], []>} : vector<8x4xf32>, vector<4x512xf32>, vector<8x512xf32> -> vector<8x512xf32>
    %c0_3 = arith.constant 0 : index
    %c0_4 = arith.constant 0 : index
    %3 = vector.load %arg3[%c0_3, %c0_4] : memref<1x512xf32, #tpu.memory_space<vmem>>, vector<1x512xf32>
    %4 = vector.broadcast %3 : vector<1x512xf32> to vector<8x512xf32>
    %5 = arith.addf %2, %4 : vector<8x512xf32>
    %cst_5 = arith.constant 0.000000e+00 : f32
    %6 = vector.broadcast %cst_5 : f32 to vector<8x512xf32>
    %7 = arith.maximumf %5, %6 : vector<8x512xf32>
    %8 = arith.truncf %7 : vector<8x512xf32> to vector<8x512xbf16>
    %c0_6 = arith.constant 0 : index
    %c0_7 = arith.constant 0 : index
    %9 = vector.load %arg4[%c0_6, %c0_7] : memref<512x256xbf16, #tpu.memory_space<vmem>>, vector<512x256xbf16>
    %cst_8 = arith.constant dense<0.000000e+00> : vector<8x256xf32>
    %10 = tpu.matmul %8, %9, %cst_8 {dimension_numbers = #tpu.dot_dimension_numbers<[1], [0], [0], [1], [0, 0, 1, 1], [], []>} : vector<8x512xbf16>, vector<512x256xbf16>, vector<8x256xf32> -> vector<8x256xf32>
    %c0_9 = arith.constant 0 : index
    %c0_10 = arith.constant 0 : index
    %11 = vector.load %arg5[%c0_9, %c0_10] : memref<1x256xf32, #tpu.memory_space<vmem>>, vector<1x256xf32>
    %12 = vector.broadcast %11 : vector<1x256xf32> to vector<8x256xf32>
    %13 = arith.addf %10, %12 : vector<8x256xf32>
    %cst_11 = arith.constant 0.000000e+00 : f32
    %14 = vector.broadcast %cst_11 : f32 to vector<8x256xf32>
    %15 = arith.maximumf %13, %14 : vector<8x256xf32>
    %16 = arith.truncf %15 : vector<8x256xf32> to vector<8x256xbf16>
    %c0_12 = arith.constant 0 : index
    %c0_13 = arith.constant 0 : index
    %17 = vector.load %arg6[%c0_12, %c0_13] : memref<256x128xbf16, #tpu.memory_space<vmem>>, vector<256x128xbf16>
    %cst_14 = arith.constant dense<0.000000e+00> : vector<8x128xf32>
    %18 = tpu.matmul %16, %17, %cst_14 {dimension_numbers = #tpu.dot_dimension_numbers<[1], [0], [0], [1], [0, 0, 1, 1], [], []>} : vector<8x256xbf16>, vector<256x128xbf16>, vector<8x128xf32> -> vector<8x128xf32>
    %c0_15 = arith.constant 0 : index
    %c0_16 = arith.constant 0 : index
    %19 = vector.load %arg7[%c0_15, %c0_16] : memref<1x128xf32, #tpu.memory_space<vmem>>, vector<1x128xf32>
    %20 = vector.broadcast %19 : vector<1x128xf32> to vector<8x128xf32>
    %21 = arith.addf %18, %20 : vector<8x128xf32>
    %22 = arith.truncf %21 : vector<8x128xf32> to vector<8x128xbf16>
    %c0_17 = arith.constant 0 : index
    %c0_18 = arith.constant 0 : index
    %23 = vector.load %arg8[%c0_17, %c0_18] : memref<8x128xbf16, #tpu.memory_space<vmem>>, vector<8x128xbf16>
    tpu.vector_store %arg8[%c0_17, %c0_18], %22 {strides = array<i32>} : memref<8x128xbf16, #tpu.memory_space<vmem>>, vector<8x128xbf16>,
    return
  }
  func.func @transform_0(%arg0: i32) -> (i32, i32) {
    %c0_i32 = arith.constant 0 : i32
    %c0_i32_0 = arith.constant 0 : i32
    return %arg0, %c0_i32 : i32, i32
  }
  func.func @transform_1(%arg0: i32) -> (i32, i32) {
    %c0_i32 = arith.constant 0 : i32
    %c0_i32_0 = arith.constant 0 : i32
    %c0_i32_1 = arith.constant 0 : i32
    return %c0_i32, %c0_i32_0 : i32, i32
  }
  func.func @transform_2(%arg0: i32) -> (i32, i32) {
    %c0_i32 = arith.constant 0 : i32
    %c0_i32_0 = arith.constant 0 : i32
    %c0_i32_1 = arith.constant 0 : i32
    return %c0_i32, %c0_i32_0 : i32, i32
  }
  func.func @transform_3(%arg0: i32) -> (i32, i32) {
    %c0_i32 = arith.constant 0 : i32
    %c0_i32_0 = arith.constant 0 : i32
    %c0_i32_1 = arith.constant 0 : i32
    return %c0_i32, %c0_i32_0 : i32, i32
  }
  func.func @transform_4(%arg0: i32) -> (i32, i32) {
    %c0_i32 = arith.constant 0 : i32
    %c0_i32_0 = arith.constant 0 : i32
    %c0_i32_1 = arith.constant 0 : i32
    return %c0_i32, %c0_i32_0 : i32, i32
  }
  func.func @transform_5(%arg0: i32) -> (i32, i32) {
    %c0_i32 = arith.constant 0 : i32
    %c0_i32_0 = arith.constant 0 : i32
    %c0_i32_1 = arith.constant 0 : i32
    return %c0_i32, %c0_i32_0 : i32, i32
  }
  func.func @transform_6(%arg0: i32) -> (i32, i32) {
    %c0_i32 = arith.constant 0 : i32
    %c0_i32_0 = arith.constant 0 : i32
    %c0_i32_1 = arith.constant 0 : i32
    return %c0_i32, %c0_i32_0 : i32, i32
  }
  func.func @transform_7(%arg0: i32) -> (i32, i32) {
    %c0_i32 = arith.constant 0 : i32
    %c0_i32_0 = arith.constant 0 : i32
    return %arg0, %c0_i32 : i32, i32
  }
}

</mosaic_0001>

<llo_original>
// kernel: tpu_custom_call.1
$region0: #{tpu_custom_call.1}
  #allocation0 [shape = 'u32[]', space=smem, size = 0x4, offset = 0x4, fixed_abs, tag = 'smem constant byte address 0x4 - core index']
  #allocation1 [shape = 'u32[144,128]{1,0:T(1,128)}', space=vmem, size = 0x12000, scoped, tag = 'internal scratch']
  %s0 = inlined_call_operand.vmem [shape: f32[8,4], index: 0, kind: input, shape index: {}]
  %s1 = inlined_call_operand.hbm [shape: f32[4,512], index: 1, kind: input, shape index: {}]
  %s2 = inlined_call_operand.vmem [shape: f32[1,512], index: 2, kind: input, shape index: {}]
  %s3 = inlined_call_operand.hbm [shape: bf16[512,256], index: 3, kind: input, shape index: {}]
  %s4 = inlined_call_operand.vmem [shape: f32[1,256], index: 4, kind: input, shape index: {}]
  %s5 = inlined_call_operand.hbm [shape: bf16[256,128], index: 5, kind: input, shape index: {}]
  %s6 = inlined_call_operand.vmem [shape: f32[1,128], index: 6, kind: input, shape index: {}]
  %s7 = inlined_call_operand.hbm [shape: bf16[8,128], index: 7, kind: output, shape index: {}]
  %s8 = sld [smem:[#allocation0]]
  $region50: #{tpu_custom_call.1} parent=0
    _
  %s10 = ssub.s32 1, %s8
  %s11 = scalar_select 0, %s10, %s8
  $region1: #{tpu_custom_call.1} parent=0
    #allocation2 [shape = 'u8[8192]{0}', space=vmem, size = 0x2000, scoped, tag = 'input window, operand 1, single buffered']
    #allocation3 [shape = 's32[1]{0}', space=sflag, size = 0x4, scoped, tag = 'scoped memory for tpu_custom_call.1']
    #allocation4 [shape = 's32[1]{0}', space=sflag, size = 0x4, scoped, tag = 'scoped memory for tpu_custom_call.1']
    #allocation5 [shape = 'u8[262144]{0}', space=vmem, size = 0x40000, scoped, tag = 'input window, operand 3, single buffered']
    #allocation6 [shape = 's32[1]{0}', space=sflag, size = 0x4, scoped, tag = 'scoped memory for tpu_custom_call.1']
    #allocation7 [shape = 'u8[65536]{0}', space=vmem, size = 0x10000, scoped, tag = 'input window, operand 5, single buffered']
    #allocation8 [shape = 'u8[2048]{0}', space=vmem, size = 0x800, scoped, tag = 'output window, operand 0, single buffered']
    %12 = vsyncpa [#allocation3], 0
    %13 = vsyncpa [#allocation6], 0
    %14 = vsyncpa [#allocation4], 0
    // Predicated region
    $region2: #{tpu_custom_call.1} parent=1 // pred_check
      _
    $region3: #{tpu_custom_call.1} parent=1 // pred_check_branch
      %16 = sbr.rel (0) target = $region5
    $region4: #{tpu_custom_call.1} parent=1 // pred_region
      _
    $region5: #{tpu_custom_call.1} parent=1 // pred_fallthru
      _
    // Predicated region
    $region6: #{tpu_custom_call.1} parent=1 // pred_check
      _
    $region7: #{tpu_custom_call.1} parent=1 // pred_check_branch
      %18 = sbr.rel (0) target = $region9
    $region8: #{tpu_custom_call.1} parent=1 // pred_region
      %s20 = ssub.s32 256, 256
      %21 = vsyncadd [#allocation3], %s20
      %s23 = sshll.u32 [#allocation2], 4
      %s24 = int_to_ptr.vmem [resolvable:$true] %s23
      %26 = dma.hbm_to_vmem [thread:$0]  %s1, 256, %s24, [#allocation3]
    $region9: #{tpu_custom_call.1} parent=1 // pred_fallthru
      _
    // Predicated region
    $region10: #{tpu_custom_call.1} parent=1 // pred_check
      _
    $region11: #{tpu_custom_call.1} parent=1 // pred_check_branch
      %28 = sbr.rel (0) target = $region13
    $region12: #{tpu_custom_call.1} parent=1 // pred_region
      _
    $region13: #{tpu_custom_call.1} parent=1 // pred_fallthru
      _
    // Predicated region
    $region14: #{tpu_custom_call.1} parent=1 // pred_check
      _
    $region15: #{tpu_custom_call.1} parent=1 // pred_check_branch
      %30 = sbr.rel (0) target = $region17
    $region16: #{tpu_custom_call.1} parent=1 // pred_region
      %s32 = ssub.s32 8192, 8192
      %33 = vsyncadd [#allocation6], %s32
      %s34 = sshll.u32 [#allocation5], 4
      %s35 = int_to_ptr.vmem [resolvable:$true] %s34
      %40 = dma.hbm_to_vmem [thread:$0]  %s3, 8192, %s35, [#allocation6], 128, 128, 8
    $region17: #{tpu_custom_call.1} parent=1 // pred_fallthru
      _
    // Predicated region
    $region18: #{tpu_custom_call.1} parent=1 // pred_check
      _
    $region19: #{tpu_custom_call.1} parent=1 // pred_check_branch
      %42 = sbr.rel (0) target = $region21
    $region20: #{tpu_custom_call.1} parent=1 // pred_region
      _
    $region21: #{tpu_custom_call.1} parent=1 // pred_fallthru
      _
    // Predicated region
    $region22: #{tpu_custom_call.1} parent=1 // pred_check
      _
    $region23: #{tpu_custom_call.1} parent=1 // pred_check_branch
      %44 = sbr.rel (0) target = $region25
    $region24: #{tpu_custom_call.1} parent=1 // pred_region
      %s46 = ssub.s32 2048, 2048
      %47 = vsyncadd [#allocation6], %s46
      %s48 = sshll.u32 [#allocation7], 4
      %s49 = int_to_ptr.vmem [resolvable:$true] %s48
      %54 = dma.hbm_to_vmem [thread:$0]  %s5, 2048, %s49, [#allocation6], 64, 64, 4
    $region25: #{tpu_custom_call.1} parent=1 // pred_fallthru
      _
    // Predicated region
    $region26: #{tpu_custom_call.1} parent=1 // pred_check
      _
    $region27: #{tpu_custom_call.1} parent=1 // pred_check_branch
      %56 = sbr.rel (0) target = $region29
    $region28: #{tpu_custom_call.1} parent=1 // pred_region
      _
    $region29: #{tpu_custom_call.1} parent=1 // pred_fallthru
      _
    // Predicated region
    $region30: #{tpu_custom_call.1} parent=1 // pred_check
      _
    $region31: #{tpu_custom_call.1} parent=1 // pred_check_branch
      %58 = sbr.rel (0) target = $region33
    $region32: #{tpu_custom_call.1} parent=1 // pred_region
      %59 = dma.done [#allocation3], 256
    $region33: #{tpu_custom_call.1} parent=1 // pred_fallthru
      _
    // Predicated region
    $region34: #{tpu_custom_call.1} parent=1 // pred_check
      _
    $region35: #{tpu_custom_call.1} parent=1 // pred_check_branch
      %61 = sbr.rel (0) target = $region37
    $region36: #{tpu_custom_call.1} parent=1 // pred_region
      %62 = dma.done [#allocation6], 8192
    $region37: #{tpu_custom_call.1} parent=1 // pred_fallthru
      _
    // Predicated region
    $region38: #{tpu_custom_call.1} parent=1 // pred_check
      _
    $region39: #{tpu_custom_call.1} parent=1 // pred_check_branch
      %64 = sbr.rel (0) target = $region41
    $region40: #{tpu_custom_call.1} parent=1 // pred_region
      %65 = dma.done [#allocation6], 2048
    $region41: #{tpu_custom_call.1} parent=1 // pred_fallthru
      _
    %v67 = vld [vmem:[%s0] sm:$0xff]
    %v68 = vld [vmem:[#allocation2] sm:$0xff]
    %v69 = vld [vmem:[#allocation2 + $0x8] sm:$0xff]
    %v70 = vld [vmem:[%s2] sm:$0xf]
    %v72 = vlaneseq
    %v73 = vshrl.u32 %v72, 7
    %v74 = vsub.s32 0, %v73
    %v75 = vrot.slane %v70, %v74
    %v76 = vlaneseq
    %v77 = vshrl.u32 %v76, 7
    %v78 = vsub.s32 1, %v77
    %v79 = vrot.slane %v70, %v78
    %v80 = vlaneseq
    %v81 = vshrl.u32 %v80, 7
    %v82 = vsub.s32 2, %v81
    %v83 = vrot.slane %v70, %v82
    %v84 = vlaneseq
    %v85 = vshrl.u32 %v84, 7
    %v86 = vsub.s32 3, %v85
    %v87 = vrot.slane %v70, %v86
    %v94 = vcombine.high %v68, %v68
    %v95 = vcombine.high %v69, %v69
    %vm96 = vcmask 31744
    %v98 = vsel %vm96, %v67, 0
    %vm100 = vcmask 1043456
    %v101 = vsel %vm100, %v68, 0
    %v103 = vsel %vm100, %v94, 0
    %v105 = vsel %vm100, %v69, 0
    %v107 = vsel %vm100, %v95, 0
    %109 = vmatprep.subr.mxu0 0.0
    %110 = vmatpush1.msra.mxu0 0.0
    %111 = vmatprep.subr.mxu0 0.0
    %112 = vmatpush1.msra.mxu0 0.0
    %113 = vmatprep.subr.mxu0 0.0
    %114 = vmatpush1.msra.mxu0 0.0
    %115 = vmatprep.subr.mxu0 0.0
    %116 = vmatpush1.msra.mxu0 0.0
    %117 = vmatprep.subr.mxu0 0.0
    %118 = vmatpush1.msra.mxu0 0.0
    %119 = vmatprep.subr.mxu0 0.0
    %120 = vmatpush1.msra.mxu0 0.0
    %121 = vmatprep.subr.mxu0 0.0
    %122 = vmatpush1.msra.mxu0 0.0
    %123 = vmatprep.subr.mxu0 0.0
    %124 = vmatpush1.msra.mxu0 0.0
    %125 = vmatprep.subr.mxu0 0.0
    %126 = vmatpush1.msra.mxu0 0.0
    %127 = vmatprep.subr.mxu0 0.0
    %128 = vmatpush1.msra.mxu0 0.0
    %129 = vmatprep.subr.mxu0 0.0
    %130 = vmatpush1.msra.mxu0 0.0
    %131 = vmatprep.subr.mxu0 0.0
    %132 = vmatpush1.msra.mxu0 0.0
    %133 = vmatprep.subr.mxu0 0.0
    %134 = vmatpush1.msra.mxu0 0.0
    %135 = vmatprep.subr.mxu0 0.0
    %136 = vmatpush1.msra.mxu0 0.0
    %137 = vmatprep.subr.mxu0 0.0
    %138 = vmatpush1.msra.mxu0 0.0
    %139 = vmatprep.subr.mxu0 %v103
    %140 = vmatpush1.msra.mxu0 %v101
    %141 = vmatprep.subr.mxu0 0.0
    %142 = vmatpush2.msra.mxu0 0.0
    %143 = vmatprep.subr.mxu0 0.0
    %144 = vmatpush2.msra.mxu0 0.0
    %145 = vmatprep.subr.mxu0 0.0
    %146 = vmatpush2.msra.mxu0 0.0
    %147 = vmatprep.subr.mxu0 0.0
    %148 = vmatpush2.msra.mxu0 0.0
    %149 = vmatprep.subr.mxu0 0.0
    %150 = vmatpush2.msra.mxu0 0.0
    %151 = vmatprep.subr.mxu0 0.0
    %152 = vmatpush2.msra.mxu0 0.0
    %153 = vmatprep.subr.mxu0 0.0
    %154 = vmatpush2.msra.mxu0 0.0
    %155 = vmatprep.subr.mxu0 0.0
    %156 = vmatpush2.msra.mxu0 0.0
    %157 = vmatprep.subr.mxu0 0.0
    %158 = vmatpush2.msra.mxu0 0.0
    %159 = vmatprep.subr.mxu0 0.0
    %160 = vmatpush2.msra.mxu0 0.0
    %161 = vmatprep.subr.mxu0 0.0
    %162 = vmatpush2.msra.mxu0 0.0
    %163 = vmatprep.subr.mxu0 0.0
    %164 = vmatpush2.msra.mxu0 0.0
    %165 = vmatprep.subr.mxu0 0.0
    %166 = vmatpush2.msra.mxu0 0.0
    %167 = vmatprep.subr.mxu0 0.0
    %168 = vmatpush2.msra.mxu0 0.0
    %169 = vmatprep.subr.mxu0 0.0
    %170 = vmatpush2.msra.mxu0 0.0
    %171 = vmatprep.subr.mxu0 0.0
    %172 = vmatpush2.msra.mxu0 0.0
    %173 = vmatprep.mubr.f32.mxu0 0.0
    %174 = vmatmul.mubr.f32.gmra.mxu0 %v98
    %v175 = vpop.f32.mrf.mxu0
    %v176 = vadd.f32 %v75, %v175
    %v177 = vpop.f32.mrf.mxu0
    %v178 = vadd.f32 %v79, %v177
    %179 = vdwg.mxu0
    %180 = vmatprep.subr.mxu0 0.0
    %181 = vmatpush1.msra.mxu0 0.0
    %182 = vmatprep.subr.mxu0 0.0
    %183 = vmatpush1.msra.mxu0 0.0
    %184 = vmatprep.subr.mxu0 0.0
    %185 = vmatpush1.msra.mxu0 0.0
    %186 = vmatprep.subr.mxu0 0.0
    %187 = vmatpush1.msra.mxu0 0.0
    %188 = vmatprep.subr.mxu0 0.0
    %189 = vmatpush1.msra.mxu0 0.0
    %190 = vmatprep.subr.mxu0 0.0
    %191 = vmatpush1.msra.mxu0 0.0
    %192 = vmatprep.subr.mxu0 0.0
    %193 = vmatpush1.msra.mxu0 0.0
    %194 = vmatprep.subr.mxu0 0.0
    %195 = vmatpush1.msra.mxu0 0.0
    %196 = vmatprep.subr.mxu0 0.0
    %197 = vmatpush1.msra.mxu0 0.0
    %198 = vmatprep.subr.mxu0 0.0
    %199 = vmatpush1.msra.mxu0 0.0
    %200 = vmatprep.subr.mxu0 0.0
    %201 = vmatpush1.msra.mxu0 0.0
    %202 = vmatprep.subr.mxu0 0.0
    %203 = vmatpush1.msra.mxu0 0.0
    %204 = vmatprep.subr.mxu0 0.0
    %205 = vmatpush1.msra.mxu0 0.0
    %206 = vmatprep.subr.mxu0 0.0
    %207 = vmatpush1.msra.mxu0 0.0
    %208 = vmatprep.subr.mxu0 0.0
    %209 = vmatpush1.msra.mxu0 0.0
    %210 = vmatprep.subr.mxu0 %v107
    %211 = vmatpush1.msra.mxu0 %v105
    %212 = vmatprep.subr.mxu0 0.0
    %213 = vmatpush2.msra.mxu0 0.0
    %214 = vmatprep.subr.mxu0 0.0
    %215 = vmatpush2.msra.mxu0 0.0
    %216 = vmatprep.subr.mxu0 0.0
    %217 = vmatpush2.msra.mxu0 0.0
    %218 = vmatprep.subr.mxu0 0.0
    %219 = vmatpush2.msra.mxu0 0.0
    %220 = vmatprep.subr.mxu0 0.0
    %221 = vmatpush2.msra.mxu0 0.0
    %222 = vmatprep.subr.mxu0 0.0
    %223 = vmatpush2.msra.mxu0 0.0
    %224 = vmatprep.subr.mxu0 0.0
    %225 = vmatpush2.msra.mxu0 0.0
    %226 = vmatprep.subr.mxu0 0.0
    %227 = vmatpush2.msra.mxu0 0.0
    %228 = vmatprep.subr.mxu0 0.0
    %229 = vmatpush2.msra.mxu0 0.0
    %230 = vmatprep.subr.mxu0 0.0
    %231 = vmatpush2.msra.mxu0 0.0
    %232 = vmatprep.subr.mxu0 0.0
    %233 = vmatpush2.msra.mxu0 0.0
    %234 = vmatprep.subr.mxu0 0.0
    %235 = vmatpush2.msra.mxu0 0.0
    %236 = vmatprep.subr.mxu0 0.0
    %237 = vmatpush2.msra.mxu0 0.0
    %238 = vmatprep.subr.mxu0 0.0
    %239 = vmatpush2.msra.mxu0 0.0
    %240 = vmatprep.subr.mxu0 0.0
    %241 = vmatpush2.msra.mxu0 0.0
    %242 = vmatprep.subr.mxu0 0.0
    %243 = vmatpush2.msra.mxu0 0.0
    %244 = vmatprep.mubr.f32.mxu0 0.0
    %245 = vmatmul.mubr.f32.gmra.mxu0 %v98
    %v246 = vpop.f32.mrf.mxu0
    %v247 = vadd.f32 %v83, %v246
    %v248 = vpop.f32.mrf.mxu0
    %v249 = vadd.f32 %v87, %v248
    %250 = vdwg.mxu0
    %v251 = vmax.f32 %v176, 0.0
    %v252 = vmax.f32 %v178, 0.0
    %v253 = vmax.f32 %v247, 0.0
    %v254 = vmax.f32 %v249, 0.0
    %v255 = vpack.c.bf16 %v251, %v251
    %v256 = vpack.c.bf16 %v252, %v252
    %v257 = vpack.c.bf16 %v253, %v253
    %v258 = vpack.c.bf16 %v254, %v254
    %v259 = vld [vmem:[#allocation5] sm:$0xff]
    %v260 = vld [vmem:[#allocation5 + $0x8] sm:$0xff]
    %v261 = vld [vmem:[#allocation5 + $0x10] sm:$0xff]
    %v262 = vld [vmem:[#allocation5 + $0x18] sm:$0xff]
    %v263 = vld [vmem:[#allocation5 + $0x20] sm:$0xff]
    %v264 = vld [vmem:[#allocation5 + $0x28] sm:$0xff]
    %v265 = vld [vmem:[#allocation5 + $0x30] sm:$0xff]
    %v266 = vld [vmem:[#allocation5 + $0x38] sm:$0xff]
    %v267 = vld [vmem:[#allocation5 + $0x40] sm:$0xff]
    %v268 = vld [vmem:[#allocation5 + $0x48] sm:$0xff]
    %v269 = vld [vmem:[#allocation5 + $0x50] sm:$0xff]
    %v270 = vld [vmem:[#allocation5 + $0x58] sm:$0xff]
    %v271 = vld [vmem:[#allocation5 + $0x60] sm:$0xff]
    %v272 = vld [vmem:[#allocation5 + $0x68] sm:$0xff]
    %v273 = vld [vmem:[#allocation5 + $0x70] sm:$0xff]
    %v274 = vld [vmem:[#allocation5 + $0x78] sm:$0xff]
    %v275 = vld [vmem:[#allocation5 + $0x80] sm:$0xff]
    %v276 = vld [vmem:[#allocation5 + $0x88] sm:$0xff]
    %v277 = vld [vmem:[#allocation5 + $0x90] sm:$0xff]
    %v278 = vld [vmem:[#allocation5 + $0x98] sm:$0xff]
    %v279 = vld [vmem:[#allocation5 + $0xa0] sm:$0xff]
    %v280 = vld [vmem:[#allocation5 + $0xa8] sm:$0xff]
    %v281 = vld [vmem:[#allocation5 + $0xb0] sm:$0xff]
    %v282 = vld [vmem:[#allocation5 + $0xb8] sm:$0xff]
    %v283 = vld [vmem:[#allocation5 + $0xc0] sm:$0xff]
    %v284 = vld [vmem:[#allocation5 + $0xc8] sm:$0xff]
    %v285 = vld [vmem:[#allocation5 + $0xd0] sm:$0xff]
    %v286 = vld [vmem:[#allocation5 + $0xd8] sm:$0xff]
    %v287 = vld [vmem:[#allocation5 + $0xe0] sm:$0xff]
    %v288 = vld [vmem:[#allocation5 + $0xe8] sm:$0xff]
    %v289 = vld [vmem:[#allocation5 + $0xf0] sm:$0xff]
    %v290 = vld [vmem:[#allocation5 + $0xf8] sm:$0xff]
    %v291 = vld [vmem:[#allocation5 + $0x100] sm:$0xff]
    %v292 = vld [vmem:[#allocation5 + $0x108] sm:$0xff]
    %v293 = vld [vmem:[#allocation5 + $0x110] sm:$0xff]
    %v294 = vld [vmem:[#allocation5 + $0x118] sm:$0xff]
    %v295 = vld [vmem:[#allocation5 + $0x120] sm:$0xff]
    %v296 = vld [vmem:[#allocation5 + $0x128] sm:$0xff]
    %v297 = vld [vmem:[#allocation5 + $0x130] sm:$0xff]
    %v298 = vld [vmem:[#allocation5 + $0x138] sm:$0xff]
    %v299 = vld [vmem:[#allocation5 + $0x140] sm:$0xff]
    %v300 = vld [vmem:[#allocation5 + $0x148] sm:$0xff]
    %v301 = vld [vmem:[#allocation5 + $0x150] sm:$0xff]
    %v302 = vld [vmem:[#allocation5 + $0x158] sm:$0xff]
    %v303 = vld [vmem:[#allocation5 + $0x160] sm:$0xff]
    %v304 = vld [vmem:[#allocation5 + $0x168] sm:$0xff]
    %v305 = vld [vmem:[#allocation5 + $0x170] sm:$0xff]
    %v306 = vld [vmem:[#allocation5 + $0x178] sm:$0xff]
    %v307 = vld [vmem:[#allocation5 + $0x180] sm:$0xff]
    %v308 = vld [vmem:[#allocation5 + $0x188] sm:$0xff]
    %v309 = vld [vmem:[#allocation5 + $0x190] sm:$0xff]
    %v310 = vld [vmem:[#allocation5 + $0x198] sm:$0xff]
    %v311 = vld [vmem:[#allocation5 + $0x1a0] sm:$0xff]
    %v312 = vld [vmem:[#allocation5 + $0x1a8] sm:$0xff]
    %v313 = vld [vmem:[#allocation5 + $0x1b0] sm:$0xff]
    %v314 = vld [vmem:[#allocation5 + $0x1b8] sm:$0xff]
    %v315 = vld [vmem:[#allocation5 + $0x1c0] sm:$0xff]
    %v316 = vld [vmem:[#allocation5 + $0x1c8] sm:$0xff]
    %v317 = vld [vmem:[#allocation5 + $0x1d0] sm:$0xff]
    %v318 = vld [vmem:[#allocation5 + $0x1d8] sm:$0xff]
    %v319 = vld [vmem:[#allocation5 + $0x1e0] sm:$0xff]
    %v320 = vld [vmem:[#allocation5 + $0x1e8] sm:$0xff]
    %v321 = vld [vmem:[#allocation5 + $0x1f0] sm:$0xff]
    %v322 = vld [vmem:[#allocation5 + $0x1f8] sm:$0xff]
    %v323 = vld [vmem:[%s4] sm:$0x3]
    %v325 = vlaneseq
    %v326 = vshrl.u32 %v325, 7
    %v327 = vsub.s32 0, %v326
    %v328 = vrot.slane %v323, %v327
    %v329 = vlaneseq
    %v330 = vshrl.u32 %v329, 7
    %v331 = vsub.s32 1, %v330
    %v332 = vrot.slane %v323, %v331
    %v399 = vunpack.c.l.b16 %v259
    %v400 = vunpack.c.h.b16 %v259
    %v401 = vunpack.c.l.b16 %v260
    %v402 = vunpack.c.h.b16 %v260
    %v403 = vunpack.c.l.b16 %v261
    %v404 = vunpack.c.h.b16 %v261
    %v405 = vunpack.c.l.b16 %v262
    %v406 = vunpack.c.h.b16 %v262
    %v407 = vunpack.c.l.b16 %v263
    %v408 = vunpack.c.h.b16 %v263
    %v409 = vunpack.c.l.b16 %v264
    %v410 = vunpack.c.h.b16 %v264
    %v411 = vunpack.c.l.b16 %v265
    %v412 = vunpack.c.h.b16 %v265
    %v413 = vunpack.c.l.b16 %v266
    %v414 = vunpack.c.h.b16 %v266
    %v415 = vunpack.c.l.b16 %v267
    %v416 = vunpack.c.h.b16 %v267
    %v417 = vunpack.c.l.b16 %v268
    %v418 = vunpack.c.h.b16 %v268
    %v419 = vunpack.c.l.b16 %v269
    %v420 = vunpack.c.h.b16 %v269
    %v421 = vunpack.c.l.b16 %v270
    %v422 = vunpack.c.h.b16 %v270
    %v423 = vunpack.c.l.b16 %v271
    %v424 = vunpack.c.h.b16 %v271
    %v425 = vunpack.c.l.b16 %v272
    %v426 = vunpack.c.h.b16 %v272
    %v427 = vunpack.c.l.b16 %v273
    %v428 = vunpack.c.h.b16 %v273
    %v429 = vunpack.c.l.b16 %v274
    %v430 = vunpack.c.h.b16 %v274
    %v431 = vunpack.c.l.b16 %v275
    %v432 = vunpack.c.h.b16 %v275
    %v433 = vunpack.c.l.b16 %v276
    %v434 = vunpack.c.h.b16 %v276
    %v435 = vunpack.c.l.b16 %v277
    %v436 = vunpack.c.h.b16 %v277
    %v437 = vunpack.c.l.b16 %v278
    %v438 = vunpack.c.h.b16 %v278
    %v439 = vunpack.c.l.b16 %v279
    %v440 = vunpack.c.h.b16 %v279
    %v441 = vunpack.c.l.b16 %v280
    %v442 = vunpack.c.h.b16 %v280
    %v443 = vunpack.c.l.b16 %v281
    %v444 = vunpack.c.h.b16 %v281
    %v445 = vunpack.c.l.b16 %v282
    %v446 = vunpack.c.h.b16 %v282
    %v447 = vunpack.c.l.b16 %v283
    %v448 = vunpack.c.h.b16 %v283
    %v449 = vunpack.c.l.b16 %v284
    %v450 = vunpack.c.h.b16 %v284
    %v451 = vunpack.c.l.b16 %v285
    %v452 = vunpack.c.h.b16 %v285
    %v453 = vunpack.c.l.b16 %v286
    %v454 = vunpack.c.h.b16 %v286
    %v455 = vunpack.c.l.b16 %v287
    %v456 = vunpack.c.h.b16 %v287
    %v457 = vunpack.c.l.b16 %v288
    %v458 = vunpack.c.h.b16 %v288
    %v459 = vunpack.c.l.b16 %v289
    %v460 = vunpack.c.h.b16 %v289
    %v461 = vunpack.c.l.b16 %v290
    %v462 = vunpack.c.h.b16 %v290
    %v463 = vunpack.c.l.b16 %v291
    %v464 = vunpack.c.h.b16 %v291
    %v465 = vunpack.c.l.b16 %v292
    %v466 = vunpack.c.h.b16 %v292
    %v467 = vunpack.c.l.b16 %v293
    %v468 = vunpack.c.h.b16 %v293
    %v469 = vunpack.c.l.b16 %v294
    %v470 = vunpack.c.h.b16 %v294
    %v471 = vunpack.c.l.b16 %v295
    %v472 = vunpack.c.h.b16 %v295
    %v473 = vunpack.c.l.b16 %v296
    %v474 = vunpack.c.h.b16 %v296
    %v475 = vunpack.c.l.b16 %v297
    %v476 = vunpack.c.h.b16 %v297
    %v477 = vunpack.c.l.b16 %v298
    %v478 = vunpack.c.h.b16 %v298
    %v479 = vunpack.c.l.b16 %v299
    %v480 = vunpack.c.h.b16 %v299
    %v481 = vunpack.c.l.b16 %v300
    %v482 = vunpack.c.h.b16 %v300
    %v483 = vunpack.c.l.b16 %v301
    %v484 = vunpack.c.h.b16 %v301
    %v485 = vunpack.c.l.b16 %v302
    %v486 = vunpack.c.h.b16 %v302
    %v487 = vunpack.c.l.b16 %v303
    %v488 = vunpack.c.h.b16 %v303
    %v489 = vunpack.c.l.b16 %v304
    %v490 = vunpack.c.h.b16 %v304
    %v491 = vunpack.c.l.b16 %v305
    %v492 = vunpack.c.h.b16 %v305
    %v493 = vunpack.c.l.b16 %v306
    %v494 = vunpack.c.h.b16 %v306
    %v495 = vunpack.c.l.b16 %v307
    %v496 = vunpack.c.h.b16 %v307
    %v497 = vunpack.c.l.b16 %v308
    %v498 = vunpack.c.h.b16 %v308
    %v499 = vunpack.c.l.b16 %v309
    %v500 = vunpack.c.h.b16 %v309
    %v501 = vunpack.c.l.b16 %v310
    %v502 = vunpack.c.h.b16 %v310
    %v503 = vunpack.c.l.b16 %v311
    %v504 = vunpack.c.h.b16 %v311
    %v505 = vunpack.c.l.b16 %v312
    %v506 = vunpack.c.h.b16 %v312
    %v507 = vunpack.c.l.b16 %v313
    %v508 = vunpack.c.h.b16 %v313
    %v509 = vunpack.c.l.b16 %v314
    %v510 = vunpack.c.h.b16 %v314
    %v511 = vunpack.c.l.b16 %v315
    %v512 = vunpack.c.h.b16 %v315
    %v513 = vunpack.c.l.b16 %v316
    %v514 = vunpack.c.h.b16 %v316
    %v515 = vunpack.c.l.b16 %v317
    %v516 = vunpack.c.h.b16 %v317
    %v517 = vunpack.c.l.b16 %v318
    %v518 = vunpack.c.h.b16 %v318
    %v519 = vunpack.c.l.b16 %v319
    %v520 = vunpack.c.h.b16 %v319
    %v521 = vunpack.c.l.b16 %v320
    %v522 = vunpack.c.h.b16 %v320
    %v523 = vunpack.c.l.b16 %v321
    %v524 = vunpack.c.h.b16 %v321
    %v525 = vunpack.c.l.b16 %v322
    %v526 = vunpack.c.h.b16 %v322
    %v527 = vpack.c.b16 %v401, %v399
    %v528 = vpack.c.b16 %v402, %v400
    %v529 = vpack.c.b16 %v405, %v403
    %v530 = vpack.c.b16 %v406, %v404
    %v531 = vpack.c.b16 %v409, %v407
    %v532 = vpack.c.b16 %v410, %v408
    %v533 = vpack.c.b16 %v413, %v411
    %v534 = vpack.c.b16 %v414, %v412
    %v535 = vpack.c.b16 %v417, %v415
    %v536 = vpack.c.b16 %v418, %v416
    %v537 = vpack.c.b16 %v421, %v419
    %v538 = vpack.c.b16 %v422, %v420
    %v539 = vpack.c.b16 %v425, %v423
    %v540 = vpack.c.b16 %v426, %v424
    %v541 = vpack.c.b16 %v429, %v427
    %v542 = vpack.c.b16 %v430, %v428
    %v543 = vpack.c.b16 %v433, %v431
    %v544 = vpack.c.b16 %v434, %v432
    %v545 = vpack.c.b16 %v437, %v435
    %v546 = vpack.c.b16 %v438, %v436
    %v547 = vpack.c.b16 %v441, %v439
    %v548 = vpack.c.b16 %v442, %v440
    %v549 = vpack.c.b16 %v445, %v443
    %v550 = vpack.c.b16 %v446, %v444
    %v551 = vpack.c.b16 %v449, %v447
    %v552 = vpack.c.b16 %v450, %v448
    %v553 = vpack.c.b16 %v453, %v451
    %v554 = vpack.c.b16 %v454, %v452
    %v555 = vpack.c.b16 %v457, %v455
    %v556 = vpack.c.b16 %v458, %v456
    %v557 = vpack.c.b16 %v461, %v459
    %v558 = vpack.c.b16 %v462, %v460
    %v559 = vpack.c.b16 %v465, %v463
    %v560 = vpack.c.b16 %v466, %v464
    %v561 = vpack.c.b16 %v469, %v467
    %v562 = vpack.c.b16 %v470, %v468
    %v563 = vpack.c.b16 %v473, %v471
    %v564 = vpack.c.b16 %v474, %v472
    %v565 = vpack.c.b16 %v477, %v475
    %v566 = vpack.c.b16 %v478, %v476
    %v567 = vpack.c.b16 %v481, %v479
    %v568 = vpack.c.b16 %v482, %v480
    %v569 = vpack.c.b16 %v485, %v483
    %v570 = vpack.c.b16 %v486, %v484
    %v571 = vpack.c.b16 %v489, %v487
    %v572 = vpack.c.b16 %v490, %v488
    %v573 = vpack.c.b16 %v493, %v491
    %v574 = vpack.c.b16 %v494, %v492
    %v575 = vpack.c.b16 %v497, %v495
    %v576 = vpack.c.b16 %v498, %v496
    %v577 = vpack.c.b16 %v501, %v499
    %v578 = vpack.c.b16 %v502, %v500
    %v579 = vpack.c.b16 %v505, %v503
    %v580 = vpack.c.b16 %v506, %v504
    %v581 = vpack.c.b16 %v509, %v507
    %v582 = vpack.c.b16 %v510, %v508
    %v583 = vpack.c.b16 %v513, %v511
    %v584 = vpack.c.b16 %v514, %v512
    %v585 = vpack.c.b16 %v517, %v515
    %v586 = vpack.c.b16 %v518, %v516
    %v587 = vpack.c.b16 %v521, %v519
    %v588 = vpack.c.b16 %v522, %v520
    %v589 = vpack.c.b16 %v525, %v523
    %v590 = vpack.c.b16 %v526, %v524
    %655 = vmatprep.subr.bf16.mxu0 %v542
    %656 = vmatpush1.bf16.msra.mxu0 %v541
    %657 = vmatprep.subr.bf16.mxu0 %v540
    %658 = vmatpush1.bf16.msra.mxu0 %v539
    %659 = vmatprep.subr.bf16.mxu0 %v538
    %660 = vmatpush1.bf16.msra.mxu0 %v537
    %661 = vmatprep.subr.bf16.mxu0 %v536
    %662 = vmatpush1.bf16.msra.mxu0 %v535
    %663 = vmatprep.subr.bf16.mxu0 %v534
    %664 = vmatpush1.bf16.msra.mxu0 %v533
    %665 = vmatprep.subr.bf16.mxu0 %v532
    %666 = vmatpush1.bf16.msra.mxu0 %v531
    %667 = vmatprep.subr.bf16.mxu0 %v530
    %668 = vmatpush1.bf16.msra.mxu0 %v529
    %669 = vmatprep.subr.bf16.mxu0 %v528
    %670 = vmatpush1.bf16.msra.mxu0 %v527
    %671 = vmatprep.subr.bf16.mxu0 %v558
    %672 = vmatpush2.bf16.msra.mxu0 %v557
    %673 = vmatprep.subr.bf16.mxu0 %v556
    %674 = vmatpush2.bf16.msra.mxu0 %v555
    %675 = vmatprep.subr.bf16.mxu0 %v554
    %676 = vmatpush2.bf16.msra.mxu0 %v553
    %677 = vmatprep.subr.bf16.mxu0 %v552
    %678 = vmatpush2.bf16.msra.mxu0 %v551
    %679 = vmatprep.subr.bf16.mxu0 %v550
    %680 = vmatpush2.bf16.msra.mxu0 %v549
    %681 = vmatprep.subr.bf16.mxu0 %v548
    %682 = vmatpush2.bf16.msra.mxu0 %v547
    %683 = vmatprep.subr.bf16.mxu0 %v546
    %684 = vmatpush2.bf16.msra.mxu0 %v545
    %685 = vmatprep.subr.bf16.mxu0 %v544
    %686 = vmatpush2.bf16.msra.mxu0 %v543
    %687 = vmatprep.mubr.bf16.mxu0 %v256
    %688 = vmatmul.mubr.bf16.gmra.mxu0 %v255
    %v689 = vpop.f32.mrf.mxu0
    %v690 = vadd.f32 %v328, %v689
    %v691 = vpop.f32.mrf.mxu0
    %v692 = vadd.f32 %v332, %v691
    %v693 = vpop.f32.mrf.mxu0
    %v694 = vpop.f32.mrf.mxu0
    %695 = vdwg.mxu0
    %696 = vmatprep.subr.bf16.mxu0 %v574
    %697 = vmatpush1.bf16.msra.mxu0 %v573
    %698 = vmatprep.subr.bf16.mxu0 %v572
    %699 = vmatpush1.bf16.msra.mxu0 %v571
    %700 = vmatprep.subr.bf16.mxu0 %v570
    %701 = vmatpush1.bf16.msra.mxu0 %v569
    %702 = vmatprep.subr.bf16.mxu0 %v568
    %703 = vmatpush1.bf16.msra.mxu0 %v567
    %704 = vmatprep.subr.bf16.mxu0 %v566
    %705 = vmatpush1.bf16.msra.mxu0 %v565
    %706 = vmatprep.subr.bf16.mxu0 %v564
    %707 = vmatpush1.bf16.msra.mxu0 %v563
    %708 = vmatprep.subr.bf16.mxu0 %v562
    %709 = vmatpush1.bf16.msra.mxu0 %v561
    %710 = vmatprep.subr.bf16.mxu0 %v560
    %711 = vmatpush1.bf16.msra.mxu0 %v559
    %712 = vmatprep.subr.bf16.mxu0 %v590
    %713 = vmatpush2.bf16.msra.mxu0 %v589
    %714 = vmatprep.subr.bf16.mxu0 %v588
    %715 = vmatpush2.bf16.msra.mxu0 %v587
    %716 = vmatprep.subr.bf16.mxu0 %v586
    %717 = vmatpush2.bf16.msra.mxu0 %v585
    %718 = vmatprep.subr.bf16.mxu0 %v584
    %719 = vmatpush2.bf16.msra.mxu0 %v583
    %720 = vmatprep.subr.bf16.mxu0 %v582
    %721 = vmatpush2.bf16.msra.mxu0 %v581
    %722 = vmatprep.subr.bf16.mxu0 %v580
    %723 = vmatpush2.bf16.msra.mxu0 %v579
    %724 = vmatprep.subr.bf16.mxu0 %v578
    %725 = vmatpush2.bf16.msra.mxu0 %v577
    %726 = vmatprep.subr.bf16.mxu0 %v576
    %727 = vmatpush2.bf16.msra.mxu0 %v575
    %728 = vmatprep.mubr.bf16.mxu0 %v258
    %729 = vmatmul.mubr.bf16.gmra.mxu0 %v257
    %v730 = vpop.f32.mrf.mxu0
    %v731 = vadd.f32 %v690, %v730
    %v732 = vpop.f32.mrf.mxu0
    %v733 = vadd.f32 %v692, %v732
    %v734 = vpop.f32.mrf.mxu0
    %v735 = vpop.f32.mrf.mxu0
    %736 = vdwg.mxu0
    %v737 = vmax.f32 %v731, 0.0
    %v738 = vmax.f32 %v733, 0.0
    %v739 = vpack.c.bf16 %v737, %v737
    %v740 = vpack.c.bf16 %v738, %v738
    %v741 = vld [vmem:[#allocation7] sm:$0xf]
    %v742 = vld [vmem:[#allocation7 + $0x4] sm:$0xf]
    %v743 = vld [vmem:[#allocation7 + $0x8] sm:$0xf]
    %v744 = vld [vmem:[#allocation7 + $0xc] sm:$0xf]
    %v745 = vld [vmem:[#allocation7 + $0x10] sm:$0xf]
    %v746 = vld [vmem:[#allocation7 + $0x14] sm:$0xf]
    %v747 = vld [vmem:[#allocation7 + $0x18] sm:$0xf]
    %v748 = vld [vmem:[#allocation7 + $0x1c] sm:$0xf]
    %v749 = vld [vmem:[#allocation7 + $0x20] sm:$0xf]
    %v750 = vld [vmem:[#allocation7 + $0x24] sm:$0xf]
    %v751 = vld [vmem:[#allocation7 + $0x28] sm:$0xf]
    %v752 = vld [vmem:[#allocation7 + $0x2c] sm:$0xf]
    %v753 = vld [vmem:[#allocation7 + $0x30] sm:$0xf]
    %v754 = vld [vmem:[#allocation7 + $0x34] sm:$0xf]
    %v755 = vld [vmem:[#allocation7 + $0x38] sm:$0xf]
    %v756 = vld [vmem:[#allocation7 + $0x3c] sm:$0xf]
    %v757 = vld [vmem:[#allocation7 + $0x40] sm:$0xf]
    %v758 = vld [vmem:[#allocation7 + $0x44] sm:$0xf]
    %v759 = vld [vmem:[#allocation7 + $0x48] sm:$0xf]
    %v760 = vld [vmem:[#allocation7 + $0x4c] sm:$0xf]
    %v761 = vld [vmem:[#allocation7 + $0x50] sm:$0xf]
    %v762 = vld [vmem:[#allocation7 + $0x54] sm:$0xf]
    %v763 = vld [vmem:[#allocation7 + $0x58] sm:$0xf]
    %v764 = vld [vmem:[#allocation7 + $0x5c] sm:$0xf]
    %v765 = vld [vmem:[#allocation7 + $0x60] sm:$0xf]
    %v766 = vld [vmem:[#allocation7 + $0x64] sm:$0xf]
    %v767 = vld [vmem:[#allocation7 + $0x68] sm:$0xf]
    %v768 = vld [vmem:[#allocation7 + $0x6c] sm:$0xf]
    %v769 = vld [vmem:[#allocation7 + $0x70] sm:$0xf]
    %v770 = vld [vmem:[#allocation7 + $0x74] sm:$0xf]
    %v771 = vld [vmem:[#allocation7 + $0x78] sm:$0xf]
    %v772 = vld [vmem:[#allocation7 + $0x7c] sm:$0xf]
    %v773 = vld [vmem:[%s6] sm:$0x1]
    %v775 = vlaneseq
    %v776 = vshrl.u32 %v775, 7
    %v777 = vsub.s32 0, %v776
    %v778 = vrot.slane %v773, %v777
    %v812 = vunpack.c.l.b16 %v741
    %v813 = vunpack.c.l.b16 %v742
    %v814 = vunpack.c.l.b16 %v743
    %v815 = vunpack.c.l.b16 %v744
    %v816 = vunpack.c.l.b16 %v745
    %v817 = vunpack.c.l.b16 %v746
    %v818 = vunpack.c.l.b16 %v747
    %v819 = vunpack.c.l.b16 %v748
    %v820 = vunpack.c.l.b16 %v749
    %v821 = vunpack.c.l.b16 %v750
    %v822 = vunpack.c.l.b16 %v751
    %v823 = vunpack.c.l.b16 %v752
    %v824 = vunpack.c.l.b16 %v753
    %v825 = vunpack.c.l.b16 %v754
    %v826 = vunpack.c.l.b16 %v755
    %v827 = vunpack.c.l.b16 %v756
    %v828 = vunpack.c.l.b16 %v757
    %v829 = vunpack.c.l.b16 %v758
    %v830 = vunpack.c.l.b16 %v759
    %v831 = vunpack.c.l.b16 %v760
    %v832 = vunpack.c.l.b16 %v761
    %v833 = vunpack.c.l.b16 %v762
    %v834 = vunpack.c.l.b16 %v763
    %v835 = vunpack.c.l.b16 %v764
    %v836 = vunpack.c.l.b16 %v765
    %v837 = vunpack.c.l.b16 %v766
    %v838 = vunpack.c.l.b16 %v767
    %v839 = vunpack.c.l.b16 %v768
    %v840 = vunpack.c.l.b16 %v769
    %v841 = vunpack.c.l.b16 %v770
    %v842 = vunpack.c.l.b16 %v771
    %v843 = vunpack.c.l.b16 %v772
    %v844 = vpack.c.b16 %v813, %v812
    %v845 = vpack.c.b16 %v815, %v814
    %v846 = vpack.c.b16 %v817, %v816
    %v847 = vpack.c.b16 %v819, %v818
    %v848 = vpack.c.b16 %v821, %v820
    %v849 = vpack.c.b16 %v823, %v822
    %v850 = vpack.c.b16 %v825, %v824
    %v851 = vpack.c.b16 %v827, %v826
    %v852 = vpack.c.b16 %v829, %v828
    %v853 = vpack.c.b16 %v831, %v830
    %v854 = vpack.c.b16 %v833, %v832
    %v855 = vpack.c.b16 %v835, %v834
    %v856 = vpack.c.b16 %v837, %v836
    %v857 = vpack.c.b16 %v839, %v838
    %v858 = vpack.c.b16 %v841, %v840
    %v859 = vpack.c.b16 %v843, %v842
    %876 = vmatprep.subr.bf16.mxu0 0
    %877 = vmatpush1.bf16.msra.mxu0 %v851
    %878 = vmatprep.subr.bf16.mxu0 0
    %879 = vmatpush1.bf16.msra.mxu0 %v850
    %880 = vmatprep.subr.bf16.mxu0 0
    %881 = vmatpush1.bf16.msra.mxu0 %v849
    %882 = vmatprep.subr.bf16.mxu0 0
    %883 = vmatpush1.bf16.msra.mxu0 %v848
    %884 = vmatprep.subr.bf16.mxu0 0
    %885 = vmatpush1.bf16.msra.mxu0 %v847
    %886 = vmatprep.subr.bf16.mxu0 0
    %887 = vmatpush1.bf16.msra.mxu0 %v846
    %888 = vmatprep.subr.bf16.mxu0 0
    %889 = vmatpush1.bf16.msra.mxu0 %v845
    %890 = vmatprep.subr.bf16.mxu0 0
    %891 = vmatpush1.bf16.msra.mxu0 %v844
    %892 = vmatprep.subr.bf16.mxu0 0
    %893 = vmatpush2.bf16.msra.mxu0 %v859
    %894 = vmatprep.subr.bf16.mxu0 0
    %895 = vmatpush2.bf16.msra.mxu0 %v858
    %896 = vmatprep.subr.bf16.mxu0 0
    %897 = vmatpush2.bf16.msra.mxu0 %v857
    %898 = vmatprep.subr.bf16.mxu0 0
    %899 = vmatpush2.bf16.msra.mxu0 %v856
    %900 = vmatprep.subr.bf16.mxu0 0
    %901 = vmatpush2.bf16.msra.mxu0 %v855
    %902 = vmatprep.subr.bf16.mxu0 0
    %903 = vmatpush2.bf16.msra.mxu0 %v854
    %904 = vmatprep.subr.bf16.mxu0 0
    %905 = vmatpush2.bf16.msra.mxu0 %v853
    %906 = vmatprep.subr.bf16.mxu0 0
    %907 = vmatpush2.bf16.msra.mxu0 %v852
    %908 = vmatprep.mubr.bf16.mxu0 %v740
    %909 = vmatmul.mubr.bf16.gmra.mxu0 %v739
    %v910 = vpop.f32.mrf.mxu0
    %v911 = vadd.f32 %v778, %v910
    %v912 = vpop.f32.mrf.mxu0
    %v913 = vpop.f32.mrf.mxu0
    %v914 = vpop.f32.mrf.mxu0
    %915 = vdwg.mxu0
    %v916 = vpack.c.bf16 %v911, %v911
    %917 = vst [vmem:[#allocation8] sm:$0xf] %v916
    // Predicated region
    $region42: #{tpu_custom_call.1} parent=1 // pred_check
      _
    $region43: #{tpu_custom_call.1} parent=1 // pred_check_branch
      %919 = sbr.rel (0) target = $region45
    $region44: #{tpu_custom_call.1} parent=1 // pred_region
      %s921 = ssub.s32 64, 64
      %922 = vsyncadd [#allocation4], %s921
      %s924 = sshll.u32 [#allocation8], 4
      %s925 = int_to_ptr.vmem [resolvable:$true] %s924
      %927 = dma.vmem_to_hbm [thread:$0]  %s925, 64, %s7, [#allocation4]
    $region45: #{tpu_custom_call.1} parent=1 // pred_fallthru
      _
    // Predicated region
    $region46: #{tpu_custom_call.1} parent=1 // pred_check
      _
    $region47: #{tpu_custom_call.1} parent=1 // pred_check_branch
      %929 = sbr.rel (0) target = $region49
    $region48: #{tpu_custom_call.1} parent=1 // pred_region
      %930 = dma.done [#allocation4], 64
    $region49: #{tpu_custom_call.1} parent=1 // pred_fallthru
      _
    %931 = vsyncpa [#allocation3], 1
    %932 = vsyncpa [#allocation6], 1
    %933 = vsyncpa [#allocation4], 1

</llo_original>
